<compile_context>
chip_gen: v6e
topology: v6e:2x2x1
jax: 0.10.0
libtpu: 0.0.40
codegen_flags: <defaults>
</compile_context>

<pallas_src>
import functools

import jax
import jax.numpy as jnp
from jax.experimental import pallas as pl
from jax.experimental.pallas import tpu as pltpu


def _focal_loss_kernel(x_ref, t_ref, out_ref, *, alpha, gamma, n_rows, block_n,
                       approx_recip):
    i = pl.program_id(0)

    x = x_ref[...].astype(jnp.float32)
    t = t_ref[...].astype(jnp.float32)

    # Fused stable sigmoid + BCE-with-logits: one exp, one log1p, one recip.
    e = jnp.exp(-jnp.abs(x))                    # exp(-|x|) in (0, 1]
    log1pe = jnp.log1p(e)                       # shared by sigmoid path & BCE
    inv = pl.reciprocal(1.0 + e, approx=approx_recip)
    p = jnp.where(x >= 0, inv, e * inv)         # == sigmoid(x)

    # pt = p*t + (1-p)*(1-t)  (folded);  w0 = alpha*t + (1-alpha)*(1-t) (folded)
    pt = 1.0 - p - t + 2.0 * (p * t)
    w = (1.0 - alpha) + (2.0 * alpha - 1.0) * t

    # (1 - pt) ** gamma : repeated multiply for small integer gamma (default 2)
    u = 1.0 - pt
    if float(gamma) == float(int(gamma)) and int(gamma) >= 0:
        n = int(gamma)
        upow = jnp.ones_like(u) if n == 0 else u
        for _ in range(max(n - 1, 0)):
            upow = upow * u
    else:
        # non-integer gamma: fall back to pow (2 EUP transcendentals / element)
        upow = jnp.power(u, gamma)
    w = w * upow

    bce = jnp.maximum(x, 0.0) - x * t + log1pe
    val = w * bce

    # Mask out-of-range rows on the (possibly partial) last tile.
    if n_rows % block_n != 0:
        row = i * block_n + jax.lax.broadcasted_iota(jnp.int32, val.shape, 0)
        val = jnp.where(row < n_rows, val, 0.0)

    # Fold (block_n, D) -> (8, D) with elementwise vreg adds (VPU only); the
    # single cross-lane reduce happens once, outside the kernel.
    partial = val.reshape(block_n // 8, 8, val.shape[-1]).sum(axis=0)
    out_ref[...] = partial[None, :, :]


def focal_loss(x, y, alpha=0.25, gamma=2.0, block_n=None,
               target_block_bytes=1 << 20, approx_reciprocal=False):
    """Sigmoid focal loss with sum reduction.

    x: [N, D] logits (f32 or bf16); y: [N, D] binary targets (f32/bf16/...).
    """
    N, D = x.shape
    assert y.shape == (N, D), "targets must have the same [N, D] shape as logits"

    # Sublane granularity for the row tile: 8 for 32-bit inputs, 16 for bf16,
    # 32 for 8-bit dtypes (native packed tile heights).
    min_itemsize = min(jnp.dtype(x.dtype).itemsize, jnp.dtype(y.dtype).itemsize)
    g = max(8, 32 // int(min_itemsize))

    # Pick the biggest row tile that keeps each input block near
    # `target_block_bytes` (~1 MiB default).  2 inputs x 2 pipeline buffers
    # stays ~4 MiB -> fits the scoped-VMEM default on v5e/v6e/v7x.
    if block_n is None:
        block_n = max(g, (target_block_bytes // (4 * D)) // g * g)
    n_pad = pl.cdiv(N, g) * g
    block_n = min(block_n, n_pad)
    block_n = max(g, (block_n // g) * g)

    grid = pl.cdiv(N, block_n)

    partials = pl.pallas_call(
        functools.partial(
            _focal_loss_kernel,
            alpha=float(alpha), gamma=float(gamma),
            n_rows=N, block_n=block_n, approx_recip=approx_reciprocal),
        out_shape=jax.ShapeDtypeStruct((grid, 8, D), jnp.float32),
        grid_spec=pltpu.PrefetchScalarGridSpec(
            num_scalar_prefetch=0,
            grid=(grid,),
            in_specs=[
                pl.BlockSpec((block_n, D), lambda i: (i, 0)),
                pl.BlockSpec((block_n, D), lambda i: (i, 0)),
            ],
            out_specs=pl.BlockSpec((1, 8, D), lambda i: (i, 0, 0)),
        ),
        compiler_params=pltpu.CompilerParams(
            # No carried accumulator -> the row axis is fully parallel
            # (shardable across the two TensorCores on v7x; harmless on v5e/v6e).
            dimension_semantics=("parallel",),
        ),
    )(x, y)

    # Tiny final reduction over (grid, 8, D) partials.
    return jnp.sum(partials)


def focal_loss_ref(x, y, alpha=0.25, gamma=2.0):
    """Pure-JAX reference mirroring the PyTorch module."""
    x = x.astype(jnp.float32)
    t = y.astype(jnp.float32)
    p = jax.nn.sigmoid(x)
    pt = p * t + (1.0 - p) * (1.0 - t)
    w = alpha * t + (1.0 - alpha) * (1.0 - t)
    w = w * jnp.power(1.0 - pt, gamma)
    bce = jnp.maximum(x, 0.0) - x * t + jnp.log1p(jnp.exp(-jnp.abs(x)))
    return jnp.sum(w * bce)


if __name__ == "__main__":
    key = jax.random.PRNGKey(0)
    k1, k2, k3, k4 = jax.random.split(key, 4)

    # Case 1: lane-aligned shape, bf16 targets (bandwidth saving), default tile.
    N1, D1 = 256, 128
    x1 = jax.random.normal(k1, (N1, D1), dtype=jnp.float32) * 2.0
    y1 = (jax.random.uniform(k2, (N1, D1)) < 0.1).astype(jnp.bfloat16)
    out1 = jax.block_until_ready(focal_loss(x1, y1))
    ref1 = jax.block_until_ready(focal_loss_ref(x1, y1))
    assert jnp.allclose(out1, ref1, rtol=1e-5, atol=1e-4), (out1, ref1)

    # Case 2: ragged N (not a multiple of the tile) exercising the row mask
    # and a multi-step parallel grid.
    N2, D2 = 300, 128
    x2 = jax.random.normal(k3, (N2, D2), dtype=jnp.float32) * 2.0
    y2 = (jax.random.uniform(k4, (N2, D2)) < 0.1).astype(jnp.float32)
    out2 = jax.block_until_ready(focal_loss(x2, y2, block_n=64))
    ref2 = jax.block_until_ready(focal_loss_ref(x2, y2))
    assert jnp.allclose(out2, ref2, rtol=1e-5, atol=1e-4), (out2, ref2)

    print("KERNEL_OK")
</pallas_src>

<mosaic_0001>
module attributes {stable_mosaic.version = 11 : i64} {
  func.func @_focal_loss_kernel(%arg0: i32, %arg1: memref<256x128xf32, #tpu.memory_space<vmem>>, %arg2: memref<256x128xbf16, #tpu.memory_space<vmem>>, %arg3: memref<1x8x128xf32, #tpu.memory_space<vmem>>) attributes {dimension_semantics = [#tpu.dimension_semantics<parallel>], iteration_bounds = array<i64: 1>, scalar_prefetch = 0 : i64, scratch_operands = 0 : i64, tpu.core_type = #tpu.core_type<tc>, window_params = [{transform_indices = @transform_0, window_bounds = array<i64: 256, 128>}, {transform_indices = @transform_1, window_bounds = array<i64: 256, 128>}, {transform_indices = @transform_2, window_bounds = array<i64: 1, 8, 128>}]} {
    %c0 = arith.constant 0 : index
    %c0_0 = arith.constant 0 : index
    %0 = vector.load %arg1[%c0, %c0_0] : memref<256x128xf32, #tpu.memory_space<vmem>>, vector<256x128xf32>
    %c0_1 = arith.constant 0 : index
    %c0_2 = arith.constant 0 : index
    %1 = vector.load %arg2[%c0_1, %c0_2] : memref<256x128xbf16, #tpu.memory_space<vmem>>, vector<256x128xbf16>
    %2 = arith.extf %1 : vector<256x128xbf16> to vector<256x128xf32>
    %3 = math.absf %0 : vector<256x128xf32>
    %cst = arith.constant 0.000000e+00 : f32
    %4 = vector.broadcast %cst : f32 to vector<256x128xf32>
    %5 = arith.subf %4, %3 : vector<256x128xf32>
    %6 = math.exp %5 : vector<256x128xf32>
    %7 = math.log1p %6 : vector<256x128xf32>
    %cst_3 = arith.constant 1.000000e+00 : f32
    %8 = vector.broadcast %cst_3 : f32 to vector<256x128xf32>
    %9 = arith.addf %8, %6 : vector<256x128xf32>
    %10 = tpu.reciprocal %9 : vector<256x128xf32> -> vector<256x128xf32>
    %cst_4 = arith.constant 0.000000e+00 : f32
    %11 = vector.broadcast %cst_4 : f32 to vector<256x128xf32>
    %12 = arith.cmpf oge, %0, %11 : vector<256x128xf32>
    %13 = arith.mulf %6, %10 : vector<256x128xf32>
    %14 = arith.select %12, %10, %13 : vector<256x128xi1>, vector<256x128xf32>
    %cst_5 = arith.constant 1.000000e+00 : f32
    %15 = vector.broadcast %cst_5 : f32 to vector<256x128xf32>
    %16 = arith.subf %15, %14 : vector<256x128xf32>
    %17 = arith.subf %16, %2 : vector<256x128xf32>
    %18 = arith.mulf %14, %2 : vector<256x128xf32>
    %cst_6 = arith.constant 2.000000e+00 : f32
    %19 = vector.broadcast %cst_6 : f32 to vector<256x128xf32>
    %20 = arith.mulf %19, %18 : vector<256x128xf32>
    %21 = arith.addf %17, %20 : vector<256x128xf32>
    %cst_7 = arith.constant -5.000000e-01 : f32
    %22 = vector.broadcast %cst_7 : f32 to vector<256x128xf32>
    %23 = arith.mulf %22, %2 : vector<256x128xf32>
    %cst_8 = arith.constant 7.500000e-01 : f32
    %24 = vector.broadcast %cst_8 : f32 to vector<256x128xf32>
    %25 = arith.addf %24, %23 : vector<256x128xf32>
    %cst_9 = arith.constant 1.000000e+00 : f32
    %26 = vector.broadcast %cst_9 : f32 to vector<256x128xf32>
    %27 = arith.subf %26, %21 : vector<256x128xf32>
    %28 = arith.mulf %27, %27 : vector<256x128xf32>
    %29 = arith.mulf %25, %28 : vector<256x128xf32>
    %cst_10 = arith.constant 0.000000e+00 : f32
    %30 = vector.broadcast %cst_10 : f32 to vector<256x128xf32>
    %31 = arith.maximumf %0, %30 : vector<256x128xf32>
    %32 = arith.mulf %0, %2 : vector<256x128xf32>
    %33 = arith.subf %31, %32 : vector<256x128xf32>
    %34 = arith.addf %33, %7 : vector<256x128xf32>
    %35 = arith.mulf %29, %34 : vector<256x128xf32>
    %36 = vector.shape_cast %35 : vector<256x128xf32> to vector<32x8x128xf32>
    %cst_11 = arith.constant dense<0.000000e+00> : vector<8x128xf32>
    %37 = vector.multi_reduction <add>, %36, %cst_11 [0] : vector<32x8x128xf32> to vector<8x128xf32>
    %38 = vector.shape_cast %37 : vector<8x128xf32> to vector<1x8x128xf32>
    %c0_12 = arith.constant 0 : index
    %c0_13 = arith.constant 0 : index
    %c0_14 = arith.constant 0 : index
    %39 = vector.load %arg3[%c0_12, %c0_13, %c0_14] : memref<1x8x128xf32, #tpu.memory_space<vmem>>, vector<1x8x128xf32>
    tpu.vector_store %arg3[%c0_12, %c0_13, %c0_14], %38 {strides = array<i32>} : memref<1x8x128xf32, #tpu.memory_space<vmem>>, vector<1x8x128xf32>,
    return
  }
  func.func @transform_0(%arg0: i32) -> (i32, i32) {
    %c0_i32 = arith.constant 0 : i32
    %c0_i32_0 = arith.constant 0 : i32
    return %arg0, %c0_i32 : i32, i32
  }
  func.func @transform_1(%arg0: i32) -> (i32, i32) {
    %c0_i32 = arith.constant 0 : i32
    %c0_i32_0 = arith.constant 0 : i32
    return %arg0, %c0_i32 : i32, i32
  }
  func.func @transform_2(%arg0: i32) -> (i32, i32, i32) {
    %c0_i32 = arith.constant 0 : i32
    %c0_i32_0 = arith.constant 0 : i32
    %c0_i32_1 = arith.constant 0 : i32
    return %arg0, %c0_i32, %c0_i32_0 : i32, i32, i32
  }
}

</mosaic_0001>

<llo_original>
// kernel: tpu_custom_call.1
$region0: #{tpu_custom_call.1}
  #allocation0 [shape = 'u32[]', space=smem, size = 0x4, offset = 0x4, fixed_abs, tag = 'smem constant byte address 0x4 - core index']
  #allocation1 [shape = 'u32[144,128]{1,0:T(1,128)}', space=vmem, size = 0x12000, scoped, tag = 'internal scratch']
  %s0 = inlined_call_operand.hbm [shape: f32[256,128], index: 0, kind: input, shape index: {}]
  %s1 = inlined_call_operand.hbm [shape: bf16[256,128], index: 1, kind: input, shape index: {}]
  %s2 = inlined_call_operand.hbm [shape: f32[1,8,128], index: 2, kind: output, shape index: {}]
  %s3 = sld [smem:[#allocation0]]
  $region26: #{tpu_custom_call.1} parent=0
    _
  %s5 = ssub.s32 1, %s3
  %s6 = scalar_select 0, %s5, %s3
  $region1: #{tpu_custom_call.1} parent=0
    #allocation2 [shape = 'u8[131072]{0}', space=vmem, size = 0x20000, scoped, tag = 'input window, operand 0, single buffered']
    #allocation3 [shape = 's32[1]{0}', space=sflag, size = 0x4, scoped, tag = 'scoped memory for tpu_custom_call.1']
    #allocation4 [shape = 's32[1]{0}', space=sflag, size = 0x4, scoped, tag = 'scoped memory for tpu_custom_call.1']
    #allocation5 [shape = 'u8[65536]{0}', space=vmem, size = 0x10000, scoped, tag = 'input window, operand 1, single buffered']
    #allocation6 [shape = 's32[1]{0}', space=sflag, size = 0x4, scoped, tag = 'scoped memory for tpu_custom_call.1']
    #allocation7 [shape = 'u8[4096]{0}', space=vmem, size = 0x1000, scoped, tag = 'output window, operand 0, single buffered']
    %7 = vsyncpa [#allocation3], 0
    %8 = vsyncpa [#allocation6], 0
    %9 = vsyncpa [#allocation4], 0
    // Predicated region
    $region2: #{tpu_custom_call.1} parent=1 // pred_check
      _
    $region3: #{tpu_custom_call.1} parent=1 // pred_check_branch
      %11 = sbr.rel (0) target = $region5
    $region4: #{tpu_custom_call.1} parent=1 // pred_region
      %s13 = ssub.s32 4096, 4096
      %14 = vsyncadd [#allocation3], %s13
      %s15 = sshll.u32 [#allocation2], 4
      %s16 = int_to_ptr.vmem [resolvable:$true] %s15
      %21 = dma.hbm_to_vmem [thread:$0]  %s0, 4096, %s16, [#allocation3], 128, 128, 8
    $region5: #{tpu_custom_call.1} parent=1 // pred_fallthru
      _
    // Predicated region
    $region6: #{tpu_custom_call.1} parent=1 // pred_check
      _
    $region7: #{tpu_custom_call.1} parent=1 // pred_check_branch
      %23 = sbr.rel (0) target = $region9
    $region8: #{tpu_custom_call.1} parent=1 // pred_region
      %s25 = ssub.s32 2048, 2048
      %26 = vsyncadd [#allocation6], %s25
      %s27 = sshll.u32 [#allocation5], 4
      %s28 = int_to_ptr.vmem [resolvable:$true] %s27
      %33 = dma.hbm_to_vmem [thread:$0]  %s1, 2048, %s28, [#allocation6], 64, 64, 4
    $region9: #{tpu_custom_call.1} parent=1 // pred_fallthru
      _
    // Predicated region
    $region10: #{tpu_custom_call.1} parent=1 // pred_check
      _
    $region11: #{tpu_custom_call.1} parent=1 // pred_check_branch
      %35 = sbr.rel (0) target = $region13
    $region12: #{tpu_custom_call.1} parent=1 // pred_region
      %36 = dma.done [#allocation3], 4096
    $region13: #{tpu_custom_call.1} parent=1 // pred_fallthru
      _
    // Predicated region
    $region14: #{tpu_custom_call.1} parent=1 // pred_check
      _
    $region15: #{tpu_custom_call.1} parent=1 // pred_check_branch
      %38 = sbr.rel (0) target = $region17
    $region16: #{tpu_custom_call.1} parent=1 // pred_region
      %39 = dma.done [#allocation6], 2048
    $region17: #{tpu_custom_call.1} parent=1 // pred_fallthru
      _
    %v40 = vld [vmem:[#allocation2] sm:$0xff]
    %v41 = vld [vmem:[#allocation2 + $0x8] sm:$0xff]
    %v42 = vld [vmem:[#allocation2 + $0x10] sm:$0xff]
    %v43 = vld [vmem:[#allocation2 + $0x18] sm:$0xff]
    %v44 = vld [vmem:[#allocation2 + $0x20] sm:$0xff]
    %v45 = vld [vmem:[#allocation2 + $0x28] sm:$0xff]
    %v46 = vld [vmem:[#allocation2 + $0x30] sm:$0xff]
    %v47 = vld [vmem:[#allocation2 + $0x38] sm:$0xff]
    %v48 = vld [vmem:[#allocation2 + $0x40] sm:$0xff]
    %v49 = vld [vmem:[#allocation2 + $0x48] sm:$0xff]
    %v50 = vld [vmem:[#allocation2 + $0x50] sm:$0xff]
    %v51 = vld [vmem:[#allocation2 + $0x58] sm:$0xff]
    %v52 = vld [vmem:[#allocation2 + $0x60] sm:$0xff]
    %v53 = vld [vmem:[#allocation2 + $0x68] sm:$0xff]
    %v54 = vld [vmem:[#allocation2 + $0x70] sm:$0xff]
    %v55 = vld [vmem:[#allocation2 + $0x78] sm:$0xff]
    %v56 = vld [vmem:[#allocation2 + $0x80] sm:$0xff]
    %v57 = vld [vmem:[#allocation2 + $0x88] sm:$0xff]
    %v58 = vld [vmem:[#allocation2 + $0x90] sm:$0xff]
    %v59 = vld [vmem:[#allocation2 + $0x98] sm:$0xff]
    %v60 = vld [vmem:[#allocation2 + $0xa0] sm:$0xff]
    %v61 = vld [vmem:[#allocation2 + $0xa8] sm:$0xff]
    %v62 = vld [vmem:[#allocation2 + $0xb0] sm:$0xff]
    %v63 = vld [vmem:[#allocation2 + $0xb8] sm:$0xff]
    %v64 = vld [vmem:[#allocation2 + $0xc0] sm:$0xff]
    %v65 = vld [vmem:[#allocation2 + $0xc8] sm:$0xff]
    %v66 = vld [vmem:[#allocation2 + $0xd0] sm:$0xff]
    %v67 = vld [vmem:[#allocation2 + $0xd8] sm:$0xff]
    %v68 = vld [vmem:[#allocation2 + $0xe0] sm:$0xff]
    %v69 = vld [vmem:[#allocation2 + $0xe8] sm:$0xff]
    %v70 = vld [vmem:[#allocation2 + $0xf0] sm:$0xff]
    %v71 = vld [vmem:[#allocation2 + $0xf8] sm:$0xff]
    %v72 = vld [vmem:[#allocation5] sm:$0xf]
    %v73 = vld [vmem:[#allocation5 + $0x4] sm:$0xf]
    %v74 = vld [vmem:[#allocation5 + $0x8] sm:$0xf]
    %v75 = vld [vmem:[#allocation5 + $0xc] sm:$0xf]
    %v76 = vld [vmem:[#allocation5 + $0x10] sm:$0xf]
    %v77 = vld [vmem:[#allocation5 + $0x14] sm:$0xf]
    %v78 = vld [vmem:[#allocation5 + $0x18] sm:$0xf]
    %v79 = vld [vmem:[#allocation5 + $0x1c] sm:$0xf]
    %v80 = vld [vmem:[#allocation5 + $0x20] sm:$0xf]
    %v81 = vld [vmem:[#allocation5 + $0x24] sm:$0xf]
    %v82 = vld [vmem:[#allocation5 + $0x28] sm:$0xf]
    %v83 = vld [vmem:[#allocation5 + $0x2c] sm:$0xf]
    %v84 = vld [vmem:[#allocation5 + $0x30] sm:$0xf]
    %v85 = vld [vmem:[#allocation5 + $0x34] sm:$0xf]
    %v86 = vld [vmem:[#allocation5 + $0x38] sm:$0xf]
    %v87 = vld [vmem:[#allocation5 + $0x3c] sm:$0xf]
    %v88 = vld [vmem:[#allocation5 + $0x40] sm:$0xf]
    %v89 = vld [vmem:[#allocation5 + $0x44] sm:$0xf]
    %v90 = vld [vmem:[#allocation5 + $0x48] sm:$0xf]
    %v91 = vld [vmem:[#allocation5 + $0x4c] sm:$0xf]
    %v92 = vld [vmem:[#allocation5 + $0x50] sm:$0xf]
    %v93 = vld [vmem:[#allocation5 + $0x54] sm:$0xf]
    %v94 = vld [vmem:[#allocation5 + $0x58] sm:$0xf]
    %v95 = vld [vmem:[#allocation5 + $0x5c] sm:$0xf]
    %v96 = vld [vmem:[#allocation5 + $0x60] sm:$0xf]
    %v97 = vld [vmem:[#allocation5 + $0x64] sm:$0xf]
    %v98 = vld [vmem:[#allocation5 + $0x68] sm:$0xf]
    %v99 = vld [vmem:[#allocation5 + $0x6c] sm:$0xf]
    %v100 = vld [vmem:[#allocation5 + $0x70] sm:$0xf]
    %v101 = vld [vmem:[#allocation5 + $0x74] sm:$0xf]
    %v102 = vld [vmem:[#allocation5 + $0x78] sm:$0xf]
    %v103 = vld [vmem:[#allocation5 + $0x7c] sm:$0xf]
    %v104 = vunpack.c.l.bf16 %v72
    %v105 = vunpack.c.l.bf16 %v73
    %v106 = vunpack.c.l.bf16 %v74
    %v107 = vunpack.c.l.bf16 %v75
    %v108 = vunpack.c.l.bf16 %v76
    %v109 = vunpack.c.l.bf16 %v77
    %v110 = vunpack.c.l.bf16 %v78
    %v111 = vunpack.c.l.bf16 %v79
    %v112 = vunpack.c.l.bf16 %v80
    %v113 = vunpack.c.l.bf16 %v81
    %v114 = vunpack.c.l.bf16 %v82
    %v115 = vunpack.c.l.bf16 %v83
    %v116 = vunpack.c.l.bf16 %v84
    %v117 = vunpack.c.l.bf16 %v85
    %v118 = vunpack.c.l.bf16 %v86
    %v119 = vunpack.c.l.bf16 %v87
    %v120 = vunpack.c.l.bf16 %v88
    %v121 = vunpack.c.l.bf16 %v89
    %v122 = vunpack.c.l.bf16 %v90
    %v123 = vunpack.c.l.bf16 %v91
    %v124 = vunpack.c.l.bf16 %v92
    %v125 = vunpack.c.l.bf16 %v93
    %v126 = vunpack.c.l.bf16 %v94
    %v127 = vunpack.c.l.bf16 %v95
    %v128 = vunpack.c.l.bf16 %v96
    %v129 = vunpack.c.l.bf16 %v97
    %v130 = vunpack.c.l.bf16 %v98
    %v131 = vunpack.c.l.bf16 %v99
    %v132 = vunpack.c.l.bf16 %v100
    %v133 = vunpack.c.l.bf16 %v101
    %v134 = vunpack.c.l.bf16 %v102
    %v135 = vunpack.c.l.bf16 %v103
    %v136 = vand.u32 2147483647, %v40
    %v137 = vand.u32 2147483647, %v41
    %v138 = vand.u32 2147483647, %v42
    %v139 = vand.u32 2147483647, %v43
    %v140 = vand.u32 2147483647, %v44
    %v141 = vand.u32 2147483647, %v45
    %v142 = vand.u32 2147483647, %v46
    %v143 = vand.u32 2147483647, %v47
    %v144 = vand.u32 2147483647, %v48
    %v145 = vand.u32 2147483647, %v49
    %v146 = vand.u32 2147483647, %v50
    %v147 = vand.u32 2147483647, %v51
    %v148 = vand.u32 2147483647, %v52
    %v149 = vand.u32 2147483647, %v53
    %v150 = vand.u32 2147483647, %v54
    %v151 = vand.u32 2147483647, %v55
    %v152 = vand.u32 2147483647, %v56
    %v153 = vand.u32 2147483647, %v57
    %v154 = vand.u32 2147483647, %v58
    %v155 = vand.u32 2147483647, %v59
    %v156 = vand.u32 2147483647, %v60
    %v157 = vand.u32 2147483647, %v61
    %v158 = vand.u32 2147483647, %v62
    %v159 = vand.u32 2147483647, %v63
    %v160 = vand.u32 2147483647, %v64
    %v161 = vand.u32 2147483647, %v65
    %v162 = vand.u32 2147483647, %v66
    %v163 = vand.u32 2147483647, %v67
    %v164 = vand.u32 2147483647, %v68
    %v165 = vand.u32 2147483647, %v69
    %v166 = vand.u32 2147483647, %v70
    %v167 = vand.u32 2147483647, %v71
    %v168 = vsub.f32 0.0, %v136
    %v169 = vsub.f32 0.0, %v137
    %v170 = vsub.f32 0.0, %v138
    %v171 = vsub.f32 0.0, %v139
    %v172 = vsub.f32 0.0, %v140
    %v173 = vsub.f32 0.0, %v141
    %v174 = vsub.f32 0.0, %v142
    %v175 = vsub.f32 0.0, %v143
    %v176 = vsub.f32 0.0, %v144
    %v177 = vsub.f32 0.0, %v145
    %v178 = vsub.f32 0.0, %v146
    %v179 = vsub.f32 0.0, %v147
    %v180 = vsub.f32 0.0, %v148
    %v181 = vsub.f32 0.0, %v149
    %v182 = vsub.f32 0.0, %v150
    %v183 = vsub.f32 0.0, %v151
    %v184 = vsub.f32 0.0, %v152
    %v185 = vsub.f32 0.0, %v153
    %v186 = vsub.f32 0.0, %v154
    %v187 = vsub.f32 0.0, %v155
    %v188 = vsub.f32 0.0, %v156
    %v189 = vsub.f32 0.0, %v157
    %v190 = vsub.f32 0.0, %v158
    %v191 = vsub.f32 0.0, %v159
    %v192 = vsub.f32 0.0, %v160
    %v193 = vsub.f32 0.0, %v161
    %v194 = vsub.f32 0.0, %v162
    %v195 = vsub.f32 0.0, %v163
    %v196 = vsub.f32 0.0, %v164
    %v197 = vsub.f32 0.0, %v165
    %v198 = vsub.f32 0.0, %v166
    %v199 = vsub.f32 0.0, %v167
    %v200 = vmul.f32 %v168, 1.442695
    %v201 = vpow.pop %v200
    %v202 = vmul.f32 %v169, 1.442695
    %v203 = vpow.pop %v202
    %v204 = vmul.f32 %v170, 1.442695
    %v205 = vpow.pop %v204
    %v206 = vmul.f32 %v171, 1.442695
    %v207 = vpow.pop %v206
    %v208 = vmul.f32 %v172, 1.442695
    %v209 = vpow.pop %v208
    %v210 = vmul.f32 %v173, 1.442695
    %v211 = vpow.pop %v210
    %v212 = vmul.f32 %v174, 1.442695
    %v213 = vpow.pop %v212
    %v214 = vmul.f32 %v175, 1.442695
    %v215 = vpow.pop %v214
    %v216 = vmul.f32 %v176, 1.442695
    %v217 = vpow.pop %v216
    %v218 = vmul.f32 %v177, 1.442695
    %v219 = vpow.pop %v218
    %v220 = vmul.f32 %v178, 1.442695
    %v221 = vpow.pop %v220
    %v222 = vmul.f32 %v179, 1.442695
    %v223 = vpow.pop %v222
    %v224 = vmul.f32 %v180, 1.442695
    %v225 = vpow.pop %v224
    %v226 = vmul.f32 %v181, 1.442695
    %v227 = vpow.pop %v226
    %v228 = vmul.f32 %v182, 1.442695
    %v229 = vpow.pop %v228
    %v230 = vmul.f32 %v183, 1.442695
    %v231 = vpow.pop %v230
    %v232 = vmul.f32 %v184, 1.442695
    %v233 = vpow.pop %v232
    %v234 = vmul.f32 %v185, 1.442695
    %v235 = vpow.pop %v234
    %v236 = vmul.f32 %v186, 1.442695
    %v237 = vpow.pop %v236
    %v238 = vmul.f32 %v187, 1.442695
    %v239 = vpow.pop %v238
    %v240 = vmul.f32 %v188, 1.442695
    %v241 = vpow.pop %v240
    %v242 = vmul.f32 %v189, 1.442695
    %v243 = vpow.pop %v242
    %v244 = vmul.f32 %v190, 1.442695
    %v245 = vpow.pop %v244
    %v246 = vmul.f32 %v191, 1.442695
    %v247 = vpow.pop %v246
    %v248 = vmul.f32 %v192, 1.442695
    %v249 = vpow.pop %v248
    %v250 = vmul.f32 %v193, 1.442695
    %v251 = vpow.pop %v250
    %v252 = vmul.f32 %v194, 1.442695
    %v253 = vpow.pop %v252
    %v254 = vmul.f32 %v195, 1.442695
    %v255 = vpow.pop %v254
    %v256 = vmul.f32 %v196, 1.442695
    %v257 = vpow.pop %v256
    %v258 = vmul.f32 %v197, 1.442695
    %v259 = vpow.pop %v258
    %v260 = vmul.f32 %v198, 1.442695
    %v261 = vpow.pop %v260
    %v262 = vmul.f32 %v199, 1.442695
    %v263 = vpow.pop %v262
    %v264 = vadd.f32 %v201, 1.0
    %v265 = vlog2.pop %v264
    %v266 = vmul.f32 %v265, 0.6931472
    %v267 = vmul.f32 -0.5, %v201
    %v268 = vadd.f32 %v267, 1.0
    %v269 = vmul.f32 %v268, %v201
    %v270 = vand.u32 2147483647, %v201
    %vm271 = vcmp.lt.f32.partialorder %v270, 0.0004427343
    %v272 = vsel %vm271, %v269, %v266
    %v273 = vadd.f32 %v203, 1.0
    %v274 = vlog2.pop %v273
    %v275 = vmul.f32 %v274, 0.6931472
    %v276 = vmul.f32 -0.5, %v203
    %v277 = vadd.f32 %v276, 1.0
    %v278 = vmul.f32 %v277, %v203
    %v279 = vand.u32 2147483647, %v203
    %vm280 = vcmp.lt.f32.partialorder %v279, 0.0004427343
    %v281 = vsel %vm280, %v278, %v275
    %v282 = vadd.f32 %v205, 1.0
    %v283 = vlog2.pop %v282
    %v284 = vmul.f32 %v283, 0.6931472
    %v285 = vmul.f32 -0.5, %v205
    %v286 = vadd.f32 %v285, 1.0
    %v287 = vmul.f32 %v286, %v205
    %v288 = vand.u32 2147483647, %v205
    %vm289 = vcmp.lt.f32.partialorder %v288, 0.0004427343
    %v290 = vsel %vm289, %v287, %v284
    %v291 = vadd.f32 %v207, 1.0
    %v292 = vlog2.pop %v291
    %v293 = vmul.f32 %v292, 0.6931472
    %v294 = vmul.f32 -0.5, %v207
    %v295 = vadd.f32 %v294, 1.0
    %v296 = vmul.f32 %v295, %v207
    %v297 = vand.u32 2147483647, %v207
    %vm298 = vcmp.lt.f32.partialorder %v297, 0.0004427343
    %v299 = vsel %vm298, %v296, %v293
    %v300 = vadd.f32 %v209, 1.0
    %v301 = vlog2.pop %v300
    %v302 = vmul.f32 %v301, 0.6931472
    %v303 = vmul.f32 -0.5, %v209
    %v304 = vadd.f32 %v303, 1.0
    %v305 = vmul.f32 %v304, %v209
    %v306 = vand.u32 2147483647, %v209
    %vm307 = vcmp.lt.f32.partialorder %v306, 0.0004427343
    %v308 = vsel %vm307, %v305, %v302
    %v309 = vadd.f32 %v211, 1.0
    %v310 = vlog2.pop %v309
    %v311 = vmul.f32 %v310, 0.6931472
    %v312 = vmul.f32 -0.5, %v211
    %v313 = vadd.f32 %v312, 1.0
    %v314 = vmul.f32 %v313, %v211
    %v315 = vand.u32 2147483647, %v211
    %vm316 = vcmp.lt.f32.partialorder %v315, 0.0004427343
    %v317 = vsel %vm316, %v314, %v311
    %v318 = vadd.f32 %v213, 1.0
    %v319 = vlog2.pop %v318
    %v320 = vmul.f32 %v319, 0.6931472
    %v321 = vmul.f32 -0.5, %v213
    %v322 = vadd.f32 %v321, 1.0
    %v323 = vmul.f32 %v322, %v213
    %v324 = vand.u32 2147483647, %v213
    %vm325 = vcmp.lt.f32.partialorder %v324, 0.0004427343
    %v326 = vsel %vm325, %v323, %v320
    %v327 = vadd.f32 %v215, 1.0
    %v328 = vlog2.pop %v327
    %v329 = vmul.f32 %v328, 0.6931472
    %v330 = vmul.f32 -0.5, %v215
    %v331 = vadd.f32 %v330, 1.0
    %v332 = vmul.f32 %v331, %v215
    %v333 = vand.u32 2147483647, %v215
    %vm334 = vcmp.lt.f32.partialorder %v333, 0.0004427343
    %v335 = vsel %vm334, %v332, %v329
    %v336 = vadd.f32 %v217, 1.0
    %v337 = vlog2.pop %v336
    %v338 = vmul.f32 %v337, 0.6931472
    %v339 = vmul.f32 -0.5, %v217
    %v340 = vadd.f32 %v339, 1.0
    %v341 = vmul.f32 %v340, %v217
    %v342 = vand.u32 2147483647, %v217
    %vm343 = vcmp.lt.f32.partialorder %v342, 0.0004427343
    %v344 = vsel %vm343, %v341, %v338
    %v345 = vadd.f32 %v219, 1.0
    %v346 = vlog2.pop %v345
    %v347 = vmul.f32 %v346, 0.6931472
    %v348 = vmul.f32 -0.5, %v219
    %v349 = vadd.f32 %v348, 1.0
    %v350 = vmul.f32 %v349, %v219
    %v351 = vand.u32 2147483647, %v219
    %vm352 = vcmp.lt.f32.partialorder %v351, 0.0004427343
    %v353 = vsel %vm352, %v350, %v347
    %v354 = vadd.f32 %v221, 1.0
    %v355 = vlog2.pop %v354
    %v356 = vmul.f32 %v355, 0.6931472
    %v357 = vmul.f32 -0.5, %v221
    %v358 = vadd.f32 %v357, 1.0
    %v359 = vmul.f32 %v358, %v221
    %v360 = vand.u32 2147483647, %v221
    %vm361 = vcmp.lt.f32.partialorder %v360, 0.0004427343
    %v362 = vsel %vm361, %v359, %v356
    %v363 = vadd.f32 %v223, 1.0
    %v364 = vlog2.pop %v363
    %v365 = vmul.f32 %v364, 0.6931472
    %v366 = vmul.f32 -0.5, %v223
    %v367 = vadd.f32 %v366, 1.0
    %v368 = vmul.f32 %v367, %v223
    %v369 = vand.u32 2147483647, %v223
    %vm370 = vcmp.lt.f32.partialorder %v369, 0.0004427343
    %v371 = vsel %vm370, %v368, %v365
    %v372 = vadd.f32 %v225, 1.0
    %v373 = vlog2.pop %v372
    %v374 = vmul.f32 %v373, 0.6931472
    %v375 = vmul.f32 -0.5, %v225
    %v376 = vadd.f32 %v375, 1.0
    %v377 = vmul.f32 %v376, %v225
    %v378 = vand.u32 2147483647, %v225
    %vm379 = vcmp.lt.f32.partialorder %v378, 0.0004427343
    %v380 = vsel %vm379, %v377, %v374
    %v381 = vadd.f32 %v227, 1.0
    %v382 = vlog2.pop %v381
    %v383 = vmul.f32 %v382, 0.6931472
    %v384 = vmul.f32 -0.5, %v227
    %v385 = vadd.f32 %v384, 1.0
    %v386 = vmul.f32 %v385, %v227
    %v387 = vand.u32 2147483647, %v227
    %vm388 = vcmp.lt.f32.partialorder %v387, 0.0004427343
    %v389 = vsel %vm388, %v386, %v383
    %v390 = vadd.f32 %v229, 1.0
    %v391 = vlog2.pop %v390
    %v392 = vmul.f32 %v391, 0.6931472
    %v393 = vmul.f32 -0.5, %v229
    %v394 = vadd.f32 %v393, 1.0
    %v395 = vmul.f32 %v394, %v229
    %v396 = vand.u32 2147483647, %v229
    %vm397 = vcmp.lt.f32.partialorder %v396, 0.0004427343
    %v398 = vsel %vm397, %v395, %v392
    %v399 = vadd.f32 %v231, 1.0
    %v400 = vlog2.pop %v399
    %v401 = vmul.f32 %v400, 0.6931472
    %v402 = vmul.f32 -0.5, %v231
    %v403 = vadd.f32 %v402, 1.0
    %v404 = vmul.f32 %v403, %v231
    %v405 = vand.u32 2147483647, %v231
    %vm406 = vcmp.lt.f32.partialorder %v405, 0.0004427343
    %v407 = vsel %vm406, %v404, %v401
    %v408 = vadd.f32 %v233, 1.0
    %v409 = vlog2.pop %v408
    %v410 = vmul.f32 %v409, 0.6931472
    %v411 = vmul.f32 -0.5, %v233
    %v412 = vadd.f32 %v411, 1.0
    %v413 = vmul.f32 %v412, %v233
    %v414 = vand.u32 2147483647, %v233
    %vm415 = vcmp.lt.f32.partialorder %v414, 0.0004427343
    %v416 = vsel %vm415, %v413, %v410
    %v417 = vadd.f32 %v235, 1.0
    %v418 = vlog2.pop %v417
    %v419 = vmul.f32 %v418, 0.6931472
    %v420 = vmul.f32 -0.5, %v235
    %v421 = vadd.f32 %v420, 1.0
    %v422 = vmul.f32 %v421, %v235
    %v423 = vand.u32 2147483647, %v235
    %vm424 = vcmp.lt.f32.partialorder %v423, 0.0004427343
    %v425 = vsel %vm424, %v422, %v419
    %v426 = vadd.f32 %v237, 1.0
    %v427 = vlog2.pop %v426
    %v428 = vmul.f32 %v427, 0.6931472
    %v429 = vmul.f32 -0.5, %v237
    %v430 = vadd.f32 %v429, 1.0
    %v431 = vmul.f32 %v430, %v237
    %v432 = vand.u32 2147483647, %v237
    %vm433 = vcmp.lt.f32.partialorder %v432, 0.0004427343
    %v434 = vsel %vm433, %v431, %v428
    %v435 = vadd.f32 %v239, 1.0
    %v436 = vlog2.pop %v435
    %v437 = vmul.f32 %v436, 0.6931472
    %v438 = vmul.f32 -0.5, %v239
    %v439 = vadd.f32 %v438, 1.0
    %v440 = vmul.f32 %v439, %v239
    %v441 = vand.u32 2147483647, %v239
    %vm442 = vcmp.lt.f32.partialorder %v441, 0.0004427343
    %v443 = vsel %vm442, %v440, %v437
    %v444 = vadd.f32 %v241, 1.0
    %v445 = vlog2.pop %v444
    %v446 = vmul.f32 %v445, 0.6931472
    %v447 = vmul.f32 -0.5, %v241
    %v448 = vadd.f32 %v447, 1.0
    %v449 = vmul.f32 %v448, %v241
    %v450 = vand.u32 2147483647, %v241
    %vm451 = vcmp.lt.f32.partialorder %v450, 0.0004427343
    %v452 = vsel %vm451, %v449, %v446
    %v453 = vadd.f32 %v243, 1.0
    %v454 = vlog2.pop %v453
    %v455 = vmul.f32 %v454, 0.6931472
    %v456 = vmul.f32 -0.5, %v243
    %v457 = vadd.f32 %v456, 1.0
    %v458 = vmul.f32 %v457, %v243
    %v459 = vand.u32 2147483647, %v243
    %vm460 = vcmp.lt.f32.partialorder %v459, 0.0004427343
    %v461 = vsel %vm460, %v458, %v455
    %v462 = vadd.f32 %v245, 1.0
    %v463 = vlog2.pop %v462
    %v464 = vmul.f32 %v463, 0.6931472
    %v465 = vmul.f32 -0.5, %v245
    %v466 = vadd.f32 %v465, 1.0
    %v467 = vmul.f32 %v466, %v245
    %v468 = vand.u32 2147483647, %v245
    %vm469 = vcmp.lt.f32.partialorder %v468, 0.0004427343
    %v470 = vsel %vm469, %v467, %v464
    %v471 = vadd.f32 %v247, 1.0
    %v472 = vlog2.pop %v471
    %v473 = vmul.f32 %v472, 0.6931472
    %v474 = vmul.f32 -0.5, %v247
    %v475 = vadd.f32 %v474, 1.0
    %v476 = vmul.f32 %v475, %v247
    %v477 = vand.u32 2147483647, %v247
    %vm478 = vcmp.lt.f32.partialorder %v477, 0.0004427343
    %v479 = vsel %vm478, %v476, %v473
    %v480 = vadd.f32 %v249, 1.0
    %v481 = vlog2.pop %v480
    %v482 = vmul.f32 %v481, 0.6931472
    %v483 = vmul.f32 -0.5, %v249
    %v484 = vadd.f32 %v483, 1.0
    %v485 = vmul.f32 %v484, %v249
    %v486 = vand.u32 2147483647, %v249
    %vm487 = vcmp.lt.f32.partialorder %v486, 0.0004427343
    %v488 = vsel %vm487, %v485, %v482
    %v489 = vadd.f32 %v251, 1.0
    %v490 = vlog2.pop %v489
    %v491 = vmul.f32 %v490, 0.6931472
    %v492 = vmul.f32 -0.5, %v251
    %v493 = vadd.f32 %v492, 1.0
    %v494 = vmul.f32 %v493, %v251
    %v495 = vand.u32 2147483647, %v251
    %vm496 = vcmp.lt.f32.partialorder %v495, 0.0004427343
    %v497 = vsel %vm496, %v494, %v491
    %v498 = vadd.f32 %v253, 1.0
    %v499 = vlog2.pop %v498
    %v500 = vmul.f32 %v499, 0.6931472
    %v501 = vmul.f32 -0.5, %v253
    %v502 = vadd.f32 %v501, 1.0
    %v503 = vmul.f32 %v502, %v253
    %v504 = vand.u32 2147483647, %v253
    %vm505 = vcmp.lt.f32.partialorder %v504, 0.0004427343
    %v506 = vsel %vm505, %v503, %v500
    %v507 = vadd.f32 %v255, 1.0
    %v508 = vlog2.pop %v507
    %v509 = vmul.f32 %v508, 0.6931472
    %v510 = vmul.f32 -0.5, %v255
    %v511 = vadd.f32 %v510, 1.0
    %v512 = vmul.f32 %v511, %v255
    %v513 = vand.u32 2147483647, %v255
    %vm514 = vcmp.lt.f32.partialorder %v513, 0.0004427343
    %v515 = vsel %vm514, %v512, %v509
    %v516 = vadd.f32 %v257, 1.0
    %v517 = vlog2.pop %v516
    %v518 = vmul.f32 %v517, 0.6931472
    %v519 = vmul.f32 -0.5, %v257
    %v520 = vadd.f32 %v519, 1.0
    %v521 = vmul.f32 %v520, %v257
    %v522 = vand.u32 2147483647, %v257
    %vm523 = vcmp.lt.f32.partialorder %v522, 0.0004427343
    %v524 = vsel %vm523, %v521, %v518
    %v525 = vadd.f32 %v259, 1.0
    %v526 = vlog2.pop %v525
    %v527 = vmul.f32 %v526, 0.6931472
    %v528 = vmul.f32 -0.5, %v259
    %v529 = vadd.f32 %v528, 1.0
    %v530 = vmul.f32 %v529, %v259
    %v531 = vand.u32 2147483647, %v259
    %vm532 = vcmp.lt.f32.partialorder %v531, 0.0004427343
    %v533 = vsel %vm532, %v530, %v527
    %v534 = vadd.f32 %v261, 1.0
    %v535 = vlog2.pop %v534
    %v536 = vmul.f32 %v535, 0.6931472
    %v537 = vmul.f32 -0.5, %v261
    %v538 = vadd.f32 %v537, 1.0
    %v539 = vmul.f32 %v538, %v261
    %v540 = vand.u32 2147483647, %v261
    %vm541 = vcmp.lt.f32.partialorder %v540, 0.0004427343
    %v542 = vsel %vm541, %v539, %v536
    %v543 = vadd.f32 %v263, 1.0
    %v544 = vlog2.pop %v543
    %v545 = vmul.f32 %v544, 0.6931472
    %v546 = vmul.f32 -0.5, %v263
    %v547 = vadd.f32 %v546, 1.0
    %v548 = vmul.f32 %v547, %v263
    %v549 = vand.u32 2147483647, %v263
    %vm550 = vcmp.lt.f32.partialorder %v549, 0.0004427343
    %v551 = vsel %vm550, %v548, %v545
    %v552 = vadd.f32 %v201, 1.0
    %v553 = vadd.f32 %v203, 1.0
    %v554 = vadd.f32 %v205, 1.0
    %v555 = vadd.f32 %v207, 1.0
    %v556 = vadd.f32 %v209, 1.0
    %v557 = vadd.f32 %v211, 1.0
    %v558 = vadd.f32 %v213, 1.0
    %v559 = vadd.f32 %v215, 1.0
    %v560 = vadd.f32 %v217, 1.0
    %v561 = vadd.f32 %v219, 1.0
    %v562 = vadd.f32 %v221, 1.0
    %v563 = vadd.f32 %v223, 1.0
    %v564 = vadd.f32 %v225, 1.0
    %v565 = vadd.f32 %v227, 1.0
    %v566 = vadd.f32 %v229, 1.0
    %v567 = vadd.f32 %v231, 1.0
    %v568 = vadd.f32 %v233, 1.0
    %v569 = vadd.f32 %v235, 1.0
    %v570 = vadd.f32 %v237, 1.0
    %v571 = vadd.f32 %v239, 1.0
    %v572 = vadd.f32 %v241, 1.0
    %v573 = vadd.f32 %v243, 1.0
    %v574 = vadd.f32 %v245, 1.0
    %v575 = vadd.f32 %v247, 1.0
    %v576 = vadd.f32 %v249, 1.0
    %v577 = vadd.f32 %v251, 1.0
    %v578 = vadd.f32 %v253, 1.0
    %v579 = vadd.f32 %v255, 1.0
    %v580 = vadd.f32 %v257, 1.0
    %v581 = vadd.f32 %v259, 1.0
    %v582 = vadd.f32 %v261, 1.0
    %v583 = vadd.f32 %v263, 1.0
    %v584 = vrcp.pop %v552
    %v585 = vrcp.pop %v553
    %v586 = vrcp.pop %v554
    %v587 = vrcp.pop %v555
    %v588 = vrcp.pop %v556
    %v589 = vrcp.pop %v557
    %v590 = vrcp.pop %v558
    %v591 = vrcp.pop %v559
    %v592 = vrcp.pop %v560
    %v593 = vrcp.pop %v561
    %v594 = vrcp.pop %v562
    %v595 = vrcp.pop %v563
    %v596 = vrcp.pop %v564
    %v597 = vrcp.pop %v565
    %v598 = vrcp.pop %v566
    %v599 = vrcp.pop %v567
    %v600 = vrcp.pop %v568
    %v601 = vrcp.pop %v569
    %v602 = vrcp.pop %v570
    %v603 = vrcp.pop %v571
    %v604 = vrcp.pop %v572
    %v605 = vrcp.pop %v573
    %v606 = vrcp.pop %v574
    %v607 = vrcp.pop %v575
    %v608 = vrcp.pop %v576
    %v609 = vrcp.pop %v577
    %v610 = vrcp.pop %v578
    %v611 = vrcp.pop %v579
    %v612 = vrcp.pop %v580
    %v613 = vrcp.pop %v581
    %v614 = vrcp.pop %v582
    %v615 = vrcp.pop %v583
    %vm616 = vcmp.ge.f32.partialorder %v40, 0.0
    %vm617 = vcmp.ge.f32.partialorder %v41, 0.0
    %vm618 = vcmp.ge.f32.partialorder %v42, 0.0
    %vm619 = vcmp.ge.f32.partialorder %v43, 0.0
    %vm620 = vcmp.ge.f32.partialorder %v44, 0.0
    %vm621 = vcmp.ge.f32.partialorder %v45, 0.0
    %vm622 = vcmp.ge.f32.partialorder %v46, 0.0
    %vm623 = vcmp.ge.f32.partialorder %v47, 0.0
    %vm624 = vcmp.ge.f32.partialorder %v48, 0.0
    %vm625 = vcmp.ge.f32.partialorder %v49, 0.0
    %vm626 = vcmp.ge.f32.partialorder %v50, 0.0
    %vm627 = vcmp.ge.f32.partialorder %v51, 0.0
    %vm628 = vcmp.ge.f32.partialorder %v52, 0.0
    %vm629 = vcmp.ge.f32.partialorder %v53, 0.0
    %vm630 = vcmp.ge.f32.partialorder %v54, 0.0
    %vm631 = vcmp.ge.f32.partialorder %v55, 0.0
    %vm632 = vcmp.ge.f32.partialorder %v56, 0.0
    %vm633 = vcmp.ge.f32.partialorder %v57, 0.0
    %vm634 = vcmp.ge.f32.partialorder %v58, 0.0
    %vm635 = vcmp.ge.f32.partialorder %v59, 0.0
    %vm636 = vcmp.ge.f32.partialorder %v60, 0.0
    %vm637 = vcmp.ge.f32.partialorder %v61, 0.0
    %vm638 = vcmp.ge.f32.partialorder %v62, 0.0
    %vm639 = vcmp.ge.f32.partialorder %v63, 0.0
    %vm640 = vcmp.ge.f32.partialorder %v64, 0.0
    %vm641 = vcmp.ge.f32.partialorder %v65, 0.0
    %vm642 = vcmp.ge.f32.partialorder %v66, 0.0
    %vm643 = vcmp.ge.f32.partialorder %v67, 0.0
    %vm644 = vcmp.ge.f32.partialorder %v68, 0.0
    %vm645 = vcmp.ge.f32.partialorder %v69, 0.0
    %vm646 = vcmp.ge.f32.partialorder %v70, 0.0
    %vm647 = vcmp.ge.f32.partialorder %v71, 0.0
    %v648 = vmul.f32 %v201, %v584
    %v649 = vmul.f32 %v203, %v585
    %v650 = vmul.f32 %v205, %v586
    %v651 = vmul.f32 %v207, %v587
    %v652 = vmul.f32 %v209, %v588
    %v653 = vmul.f32 %v211, %v589
    %v654 = vmul.f32 %v213, %v590
    %v655 = vmul.f32 %v215, %v591
    %v656 = vmul.f32 %v217, %v592
    %v657 = vmul.f32 %v219, %v593
    %v658 = vmul.f32 %v221, %v594
    %v659 = vmul.f32 %v223, %v595
    %v660 = vmul.f32 %v225, %v596
    %v661 = vmul.f32 %v227, %v597
    %v662 = vmul.f32 %v229, %v598
    %v663 = vmul.f32 %v231, %v599
    %v664 = vmul.f32 %v233, %v600
    %v665 = vmul.f32 %v235, %v601
    %v666 = vmul.f32 %v237, %v602
    %v667 = vmul.f32 %v239, %v603
    %v668 = vmul.f32 %v241, %v604
    %v669 = vmul.f32 %v243, %v605
    %v670 = vmul.f32 %v245, %v606
    %v671 = vmul.f32 %v247, %v607
    %v672 = vmul.f32 %v249, %v608
    %v673 = vmul.f32 %v251, %v609
    %v674 = vmul.f32 %v253, %v610
    %v675 = vmul.f32 %v255, %v611
    %v676 = vmul.f32 %v257, %v612
    %v677 = vmul.f32 %v259, %v613
    %v678 = vmul.f32 %v261, %v614
    %v679 = vmul.f32 %v263, %v615
    %v680 = vsel %vm616, %v584, %v648
    %v681 = vsel %vm617, %v585, %v649
    %v682 = vsel %vm618, %v586, %v650
    %v683 = vsel %vm619, %v587, %v651
    %v684 = vsel %vm620, %v588, %v652
    %v685 = vsel %vm621, %v589, %v653
    %v686 = vsel %vm622, %v590, %v654
    %v687 = vsel %vm623, %v591, %v655
    %v688 = vsel %vm624, %v592, %v656
    %v689 = vsel %vm625, %v593, %v657
    %v690 = vsel %vm626, %v594, %v658
    %v691 = vsel %vm627, %v595, %v659
    %v692 = vsel %vm628, %v596, %v660
    %v693 = vsel %vm629, %v597, %v661
    %v694 = vsel %vm630, %v598, %v662
    %v695 = vsel %vm631, %v599, %v663
    %v696 = vsel %vm632, %v600, %v664
    %v697 = vsel %vm633, %v601, %v665
    %v698 = vsel %vm634, %v602, %v666
    %v699 = vsel %vm635, %v603, %v667
    %v700 = vsel %vm636, %v604, %v668
    %v701 = vsel %vm637, %v605, %v669
    %v702 = vsel %vm638, %v606, %v670
    %v703 = vsel %vm639, %v607, %v671
    %v704 = vsel %vm640, %v608, %v672
    %v705 = vsel %vm641, %v609, %v673
    %v706 = vsel %vm642, %v610, %v674
    %v707 = vsel %vm643, %v611, %v675
    %v708 = vsel %vm644, %v612, %v676
    %v709 = vsel %vm645, %v613, %v677
    %v710 = vsel %vm646, %v614, %v678
    %v711 = vsel %vm647, %v615, %v679
    %v712 = vsub.f32 1.0, %v680
    %v713 = vsub.f32 1.0, %v681
    %v714 = vsub.f32 1.0, %v682
    %v715 = vsub.f32 1.0, %v683
    %v716 = vsub.f32 1.0, %v684
    %v717 = vsub.f32 1.0, %v685
    %v718 = vsub.f32 1.0, %v686
    %v719 = vsub.f32 1.0, %v687
    %v720 = vsub.f32 1.0, %v688
    %v721 = vsub.f32 1.0, %v689
    %v722 = vsub.f32 1.0, %v690
    %v723 = vsub.f32 1.0, %v691
    %v724 = vsub.f32 1.0, %v692
    %v725 = vsub.f32 1.0, %v693
    %v726 = vsub.f32 1.0, %v694
    %v727 = vsub.f32 1.0, %v695
    %v728 = vsub.f32 1.0, %v696
    %v729 = vsub.f32 1.0, %v697
    %v730 = vsub.f32 1.0, %v698
    %v731 = vsub.f32 1.0, %v699
    %v732 = vsub.f32 1.0, %v700
    %v733 = vsub.f32 1.0, %v701
    %v734 = vsub.f32 1.0, %v702
    %v735 = vsub.f32 1.0, %v703
    %v736 = vsub.f32 1.0, %v704
    %v737 = vsub.f32 1.0, %v705
    %v738 = vsub.f32 1.0, %v706
    %v739 = vsub.f32 1.0, %v707
    %v740 = vsub.f32 1.0, %v708
    %v741 = vsub.f32 1.0, %v709
    %v742 = vsub.f32 1.0, %v710
    %v743 = vsub.f32 1.0, %v711
    %v744 = vsub.f32 %v712, %v104
    %v745 = vsub.f32 %v713, %v105
    %v746 = vsub.f32 %v714, %v106
    %v747 = vsub.f32 %v715, %v107
    %v748 = vsub.f32 %v716, %v108
    %v749 = vsub.f32 %v717, %v109
    %v750 = vsub.f32 %v718, %v110
    %v751 = vsub.f32 %v719, %v111
    %v752 = vsub.f32 %v720, %v112
    %v753 = vsub.f32 %v721, %v113
    %v754 = vsub.f32 %v722, %v114
    %v755 = vsub.f32 %v723, %v115
    %v756 = vsub.f32 %v724, %v116
    %v757 = vsub.f32 %v725, %v117
    %v758 = vsub.f32 %v726, %v118
    %v759 = vsub.f32 %v727, %v119
    %v760 = vsub.f32 %v728, %v120
    %v761 = vsub.f32 %v729, %v121
    %v762 = vsub.f32 %v730, %v122
    %v763 = vsub.f32 %v731, %v123
    %v764 = vsub.f32 %v732, %v124
    %v765 = vsub.f32 %v733, %v125
    %v766 = vsub.f32 %v734, %v126
    %v767 = vsub.f32 %v735, %v127
    %v768 = vsub.f32 %v736, %v128
    %v769 = vsub.f32 %v737, %v129
    %v770 = vsub.f32 %v738, %v130
    %v771 = vsub.f32 %v739, %v131
    %v772 = vsub.f32 %v740, %v132
    %v773 = vsub.f32 %v741, %v133
    %v774 = vsub.f32 %v742, %v134
    %v775 = vsub.f32 %v743, %v135
    %v776 = vmul.f32 %v680, %v104
    %v777 = vmul.f32 %v681, %v105
    %v778 = vmul.f32 %v682, %v106
    %v779 = vmul.f32 %v683, %v107
    %v780 = vmul.f32 %v684, %v108
    %v781 = vmul.f32 %v685, %v109
    %v782 = vmul.f32 %v686, %v110
    %v783 = vmul.f32 %v687, %v111
    %v784 = vmul.f32 %v688, %v112
    %v785 = vmul.f32 %v689, %v113
    %v786 = vmul.f32 %v690, %v114
    %v787 = vmul.f32 %v691, %v115
    %v788 = vmul.f32 %v692, %v116
    %v789 = vmul.f32 %v693, %v117
    %v790 = vmul.f32 %v694, %v118
    %v791 = vmul.f32 %v695, %v119
    %v792 = vmul.f32 %v696, %v120
    %v793 = vmul.f32 %v697, %v121
    %v794 = vmul.f32 %v698, %v122
    %v795 = vmul.f32 %v699, %v123
    %v796 = vmul.f32 %v700, %v124
    %v797 = vmul.f32 %v701, %v125
    %v798 = vmul.f32 %v702, %v126
    %v799 = vmul.f32 %v703, %v127
    %v800 = vmul.f32 %v704, %v128
    %v801 = vmul.f32 %v705, %v129
    %v802 = vmul.f32 %v706, %v130
    %v803 = vmul.f32 %v707, %v131
    %v804 = vmul.f32 %v708, %v132
    %v805 = vmul.f32 %v709, %v133
    %v806 = vmul.f32 %v710, %v134
    %v807 = vmul.f32 %v711, %v135
    %v808 = vmul.f32 %v776, 2.0
    %v809 = vmul.f32 %v777, 2.0
    %v810 = vmul.f32 %v778, 2.0
    %v811 = vmul.f32 %v779, 2.0
    %v812 = vmul.f32 %v780, 2.0
    %v813 = vmul.f32 %v781, 2.0
    %v814 = vmul.f32 %v782, 2.0
    %v815 = vmul.f32 %v783, 2.0
    %v816 = vmul.f32 %v784, 2.0
    %v817 = vmul.f32 %v785, 2.0
    %v818 = vmul.f32 %v786, 2.0
    %v819 = vmul.f32 %v787, 2.0
    %v820 = vmul.f32 %v788, 2.0
    %v821 = vmul.f32 %v789, 2.0
    %v822 = vmul.f32 %v790, 2.0
    %v823 = vmul.f32 %v791, 2.0
    %v824 = vmul.f32 %v792, 2.0
    %v825 = vmul.f32 %v793, 2.0
    %v826 = vmul.f32 %v794, 2.0
    %v827 = vmul.f32 %v795, 2.0
    %v828 = vmul.f32 %v796, 2.0
    %v829 = vmul.f32 %v797, 2.0
    %v830 = vmul.f32 %v798, 2.0
    %v831 = vmul.f32 %v799, 2.0
    %v832 = vmul.f32 %v800, 2.0
    %v833 = vmul.f32 %v801, 2.0
    %v834 = vmul.f32 %v802, 2.0
    %v835 = vmul.f32 %v803, 2.0
    %v836 = vmul.f32 %v804, 2.0
    %v837 = vmul.f32 %v805, 2.0
    %v838 = vmul.f32 %v806, 2.0
    %v839 = vmul.f32 %v807, 2.0
    %v840 = vadd.f32 %v744, %v808
    %v841 = vadd.f32 %v745, %v809
    %v842 = vadd.f32 %v746, %v810
    %v843 = vadd.f32 %v747, %v811
    %v844 = vadd.f32 %v748, %v812
    %v845 = vadd.f32 %v749, %v813
    %v846 = vadd.f32 %v750, %v814
    %v847 = vadd.f32 %v751, %v815
    %v848 = vadd.f32 %v752, %v816
    %v849 = vadd.f32 %v753, %v817
    %v850 = vadd.f32 %v754, %v818
    %v851 = vadd.f32 %v755, %v819
    %v852 = vadd.f32 %v756, %v820
    %v853 = vadd.f32 %v757, %v821
    %v854 = vadd.f32 %v758, %v822
    %v855 = vadd.f32 %v759, %v823
    %v856 = vadd.f32 %v760, %v824
    %v857 = vadd.f32 %v761, %v825
    %v858 = vadd.f32 %v762, %v826
    %v859 = vadd.f32 %v763, %v827
    %v860 = vadd.f32 %v764, %v828
    %v861 = vadd.f32 %v765, %v829
    %v862 = vadd.f32 %v766, %v830
    %v863 = vadd.f32 %v767, %v831
    %v864 = vadd.f32 %v768, %v832
    %v865 = vadd.f32 %v769, %v833
    %v866 = vadd.f32 %v770, %v834
    %v867 = vadd.f32 %v771, %v835
    %v868 = vadd.f32 %v772, %v836
    %v869 = vadd.f32 %v773, %v837
    %v870 = vadd.f32 %v774, %v838
    %v871 = vadd.f32 %v775, %v839
    %v872 = vmul.f32 %v104, -0.5
    %v873 = vmul.f32 %v105, -0.5
    %v874 = vmul.f32 %v106, -0.5
    %v875 = vmul.f32 %v107, -0.5
    %v876 = vmul.f32 %v108, -0.5
    %v877 = vmul.f32 %v109, -0.5
    %v878 = vmul.f32 %v110, -0.5
    %v879 = vmul.f32 %v111, -0.5
    %v880 = vmul.f32 %v112, -0.5
    %v881 = vmul.f32 %v113, -0.5
    %v882 = vmul.f32 %v114, -0.5
    %v883 = vmul.f32 %v115, -0.5
    %v884 = vmul.f32 %v116, -0.5
    %v885 = vmul.f32 %v117, -0.5
    %v886 = vmul.f32 %v118, -0.5
    %v887 = vmul.f32 %v119, -0.5
    %v888 = vmul.f32 %v120, -0.5
    %v889 = vmul.f32 %v121, -0.5
    %v890 = vmul.f32 %v122, -0.5
    %v891 = vmul.f32 %v123, -0.5
    %v892 = vmul.f32 %v124, -0.5
    %v893 = vmul.f32 %v125, -0.5
    %v894 = vmul.f32 %v126, -0.5
    %v895 = vmul.f32 %v127, -0.5
    %v896 = vmul.f32 %v128, -0.5
    %v897 = vmul.f32 %v129, -0.5
    %v898 = vmul.f32 %v130, -0.5
    %v899 = vmul.f32 %v131, -0.5
    %v900 = vmul.f32 %v132, -0.5
    %v901 = vmul.f32 %v133, -0.5
    %v902 = vmul.f32 %v134, -0.5
    %v903 = vmul.f32 %v135, -0.5
    %v904 = vadd.f32 %v872, 0.75
    %v905 = vadd.f32 %v873, 0.75
    %v906 = vadd.f32 %v874, 0.75
    %v907 = vadd.f32 %v875, 0.75
    %v908 = vadd.f32 %v876, 0.75
    %v909 = vadd.f32 %v877, 0.75
    %v910 = vadd.f32 %v878, 0.75
    %v911 = vadd.f32 %v879, 0.75
    %v912 = vadd.f32 %v880, 0.75
    %v913 = vadd.f32 %v881, 0.75
    %v914 = vadd.f32 %v882, 0.75
    %v915 = vadd.f32 %v883, 0.75
    %v916 = vadd.f32 %v884, 0.75
    %v917 = vadd.f32 %v885, 0.75
    %v918 = vadd.f32 %v886, 0.75
    %v919 = vadd.f32 %v887, 0.75
    %v920 = vadd.f32 %v888, 0.75
    %v921 = vadd.f32 %v889, 0.75
    %v922 = vadd.f32 %v890, 0.75
    %v923 = vadd.f32 %v891, 0.75
    %v924 = vadd.f32 %v892, 0.75
    %v925 = vadd.f32 %v893, 0.75
    %v926 = vadd.f32 %v894, 0.75
    %v927 = vadd.f32 %v895, 0.75
    %v928 = vadd.f32 %v896, 0.75
    %v929 = vadd.f32 %v897, 0.75
    %v930 = vadd.f32 %v898, 0.75
    %v931 = vadd.f32 %v899, 0.75
    %v932 = vadd.f32 %v900, 0.75
    %v933 = vadd.f32 %v901, 0.75
    %v934 = vadd.f32 %v902, 0.75
    %v935 = vadd.f32 %v903, 0.75
    %v936 = vsub.f32 1.0, %v840
    %v937 = vsub.f32 1.0, %v841
    %v938 = vsub.f32 1.0, %v842
    %v939 = vsub.f32 1.0, %v843
    %v940 = vsub.f32 1.0, %v844
    %v941 = vsub.f32 1.0, %v845
    %v942 = vsub.f32 1.0, %v846
    %v943 = vsub.f32 1.0, %v847
    %v944 = vsub.f32 1.0, %v848
    %v945 = vsub.f32 1.0, %v849
    %v946 = vsub.f32 1.0, %v850
    %v947 = vsub.f32 1.0, %v851
    %v948 = vsub.f32 1.0, %v852
    %v949 = vsub.f32 1.0, %v853
    %v950 = vsub.f32 1.0, %v854
    %v951 = vsub.f32 1.0, %v855
    %v952 = vsub.f32 1.0, %v856
    %v953 = vsub.f32 1.0, %v857
    %v954 = vsub.f32 1.0, %v858
    %v955 = vsub.f32 1.0, %v859
    %v956 = vsub.f32 1.0, %v860
    %v957 = vsub.f32 1.0, %v861
    %v958 = vsub.f32 1.0, %v862
    %v959 = vsub.f32 1.0, %v863
    %v960 = vsub.f32 1.0, %v864
    %v961 = vsub.f32 1.0, %v865
    %v962 = vsub.f32 1.0, %v866
    %v963 = vsub.f32 1.0, %v867
    %v964 = vsub.f32 1.0, %v868
    %v965 = vsub.f32 1.0, %v869
    %v966 = vsub.f32 1.0, %v870
    %v967 = vsub.f32 1.0, %v871
    %v968 = vmul.f32 %v936, %v936
    %v969 = vmul.f32 %v937, %v937
    %v970 = vmul.f32 %v938, %v938
    %v971 = vmul.f32 %v939, %v939
    %v972 = vmul.f32 %v940, %v940
    %v973 = vmul.f32 %v941, %v941
    %v974 = vmul.f32 %v942, %v942
    %v975 = vmul.f32 %v943, %v943
    %v976 = vmul.f32 %v944, %v944
    %v977 = vmul.f32 %v945, %v945
    %v978 = vmul.f32 %v946, %v946
    %v979 = vmul.f32 %v947, %v947
    %v980 = vmul.f32 %v948, %v948
    %v981 = vmul.f32 %v949, %v949
    %v982 = vmul.f32 %v950, %v950
    %v983 = vmul.f32 %v951, %v951
    %v984 = vmul.f32 %v952, %v952
    %v985 = vmul.f32 %v953, %v953
    %v986 = vmul.f32 %v954, %v954
    %v987 = vmul.f32 %v955, %v955
    %v988 = vmul.f32 %v956, %v956
    %v989 = vmul.f32 %v957, %v957
    %v990 = vmul.f32 %v958, %v958
    %v991 = vmul.f32 %v959, %v959
    %v992 = vmul.f32 %v960, %v960
    %v993 = vmul.f32 %v961, %v961
    %v994 = vmul.f32 %v962, %v962
    %v995 = vmul.f32 %v963, %v963
    %v996 = vmul.f32 %v964, %v964
    %v997 = vmul.f32 %v965, %v965
    %v998 = vmul.f32 %v966, %v966
    %v999 = vmul.f32 %v967, %v967
    %v1000 = vmul.f32 %v904, %v968
    %v1001 = vmul.f32 %v905, %v969
    %v1002 = vmul.f32 %v906, %v970
    %v1003 = vmul.f32 %v907, %v971
    %v1004 = vmul.f32 %v908, %v972
    %v1005 = vmul.f32 %v909, %v973
    %v1006 = vmul.f32 %v910, %v974
    %v1007 = vmul.f32 %v911, %v975
    %v1008 = vmul.f32 %v912, %v976
    %v1009 = vmul.f32 %v913, %v977
    %v1010 = vmul.f32 %v914, %v978
    %v1011 = vmul.f32 %v915, %v979
    %v1012 = vmul.f32 %v916, %v980
    %v1013 = vmul.f32 %v917, %v981
    %v1014 = vmul.f32 %v918, %v982
    %v1015 = vmul.f32 %v919, %v983
    %v1016 = vmul.f32 %v920, %v984
    %v1017 = vmul.f32 %v921, %v985
    %v1018 = vmul.f32 %v922, %v986
    %v1019 = vmul.f32 %v923, %v987
    %v1020 = vmul.f32 %v924, %v988
    %v1021 = vmul.f32 %v925, %v989
    %v1022 = vmul.f32 %v926, %v990
    %v1023 = vmul.f32 %v927, %v991
    %v1024 = vmul.f32 %v928, %v992
    %v1025 = vmul.f32 %v929, %v993
    %v1026 = vmul.f32 %v930, %v994
    %v1027 = vmul.f32 %v931, %v995
    %v1028 = vmul.f32 %v932, %v996
    %v1029 = vmul.f32 %v933, %v997
    %v1030 = vmul.f32 %v934, %v998
    %v1031 = vmul.f32 %v935, %v999
    %v1032 = vmax.f32 %v40, 0.0
    %v1033 = vmax.f32 %v41, 0.0
    %v1034 = vmax.f32 %v42, 0.0
    %v1035 = vmax.f32 %v43, 0.0
    %v1036 = vmax.f32 %v44, 0.0
    %v1037 = vmax.f32 %v45, 0.0
    %v1038 = vmax.f32 %v46, 0.0
    %v1039 = vmax.f32 %v47, 0.0
    %v1040 = vmax.f32 %v48, 0.0
    %v1041 = vmax.f32 %v49, 0.0
    %v1042 = vmax.f32 %v50, 0.0
    %v1043 = vmax.f32 %v51, 0.0
    %v1044 = vmax.f32 %v52, 0.0
    %v1045 = vmax.f32 %v53, 0.0
    %v1046 = vmax.f32 %v54, 0.0
    %v1047 = vmax.f32 %v55, 0.0
    %v1048 = vmax.f32 %v56, 0.0
    %v1049 = vmax.f32 %v57, 0.0
    %v1050 = vmax.f32 %v58, 0.0
    %v1051 = vmax.f32 %v59, 0.0
    %v1052 = vmax.f32 %v60, 0.0
    %v1053 = vmax.f32 %v61, 0.0
    %v1054 = vmax.f32 %v62, 0.0
    %v1055 = vmax.f32 %v63, 0.0
    %v1056 = vmax.f32 %v64, 0.0
    %v1057 = vmax.f32 %v65, 0.0
    %v1058 = vmax.f32 %v66, 0.0
    %v1059 = vmax.f32 %v67, 0.0
    %v1060 = vmax.f32 %v68, 0.0
    %v1061 = vmax.f32 %v69, 0.0
    %v1062 = vmax.f32 %v70, 0.0
    %v1063 = vmax.f32 %v71, 0.0
    %v1064 = vmul.f32 %v40, %v104
    %v1065 = vmul.f32 %v41, %v105
    %v1066 = vmul.f32 %v42, %v106
    %v1067 = vmul.f32 %v43, %v107
    %v1068 = vmul.f32 %v44, %v108
    %v1069 = vmul.f32 %v45, %v109
    %v1070 = vmul.f32 %v46, %v110
    %v1071 = vmul.f32 %v47, %v111
    %v1072 = vmul.f32 %v48, %v112
    %v1073 = vmul.f32 %v49, %v113
    %v1074 = vmul.f32 %v50, %v114
    %v1075 = vmul.f32 %v51, %v115
    %v1076 = vmul.f32 %v52, %v116
    %v1077 = vmul.f32 %v53, %v117
    %v1078 = vmul.f32 %v54, %v118
    %v1079 = vmul.f32 %v55, %v119
    %v1080 = vmul.f32 %v56, %v120
    %v1081 = vmul.f32 %v57, %v121
    %v1082 = vmul.f32 %v58, %v122
    %v1083 = vmul.f32 %v59, %v123
    %v1084 = vmul.f32 %v60, %v124
    %v1085 = vmul.f32 %v61, %v125
    %v1086 = vmul.f32 %v62, %v126
    %v1087 = vmul.f32 %v63, %v127
    %v1088 = vmul.f32 %v64, %v128
    %v1089 = vmul.f32 %v65, %v129
    %v1090 = vmul.f32 %v66, %v130
    %v1091 = vmul.f32 %v67, %v131
    %v1092 = vmul.f32 %v68, %v132
    %v1093 = vmul.f32 %v69, %v133
    %v1094 = vmul.f32 %v70, %v134
    %v1095 = vmul.f32 %v71, %v135
    %v1096 = vsub.f32 %v1032, %v1064
    %v1097 = vsub.f32 %v1033, %v1065
    %v1098 = vsub.f32 %v1034, %v1066
    %v1099 = vsub.f32 %v1035, %v1067
    %v1100 = vsub.f32 %v1036, %v1068
    %v1101 = vsub.f32 %v1037, %v1069
    %v1102 = vsub.f32 %v1038, %v1070
    %v1103 = vsub.f32 %v1039, %v1071
    %v1104 = vsub.f32 %v1040, %v1072
    %v1105 = vsub.f32 %v1041, %v1073
    %v1106 = vsub.f32 %v1042, %v1074
    %v1107 = vsub.f32 %v1043, %v1075
    %v1108 = vsub.f32 %v1044, %v1076
    %v1109 = vsub.f32 %v1045, %v1077
    %v1110 = vsub.f32 %v1046, %v1078
    %v1111 = vsub.f32 %v1047, %v1079
    %v1112 = vsub.f32 %v1048, %v1080
    %v1113 = vsub.f32 %v1049, %v1081
    %v1114 = vsub.f32 %v1050, %v1082
    %v1115 = vsub.f32 %v1051, %v1083
    %v1116 = vsub.f32 %v1052, %v1084
    %v1117 = vsub.f32 %v1053, %v1085
    %v1118 = vsub.f32 %v1054, %v1086
    %v1119 = vsub.f32 %v1055, %v1087
    %v1120 = vsub.f32 %v1056, %v1088
    %v1121 = vsub.f32 %v1057, %v1089
    %v1122 = vsub.f32 %v1058, %v1090
    %v1123 = vsub.f32 %v1059, %v1091
    %v1124 = vsub.f32 %v1060, %v1092
    %v1125 = vsub.f32 %v1061, %v1093
    %v1126 = vsub.f32 %v1062, %v1094
    %v1127 = vsub.f32 %v1063, %v1095
    %v1128 = vadd.f32 %v1096, %v272
    %v1129 = vadd.f32 %v1097, %v281
    %v1130 = vadd.f32 %v1098, %v290
    %v1131 = vadd.f32 %v1099, %v299
    %v1132 = vadd.f32 %v1100, %v308
    %v1133 = vadd.f32 %v1101, %v317
    %v1134 = vadd.f32 %v1102, %v326
    %v1135 = vadd.f32 %v1103, %v335
    %v1136 = vadd.f32 %v1104, %v344
    %v1137 = vadd.f32 %v1105, %v353
    %v1138 = vadd.f32 %v1106, %v362
    %v1139 = vadd.f32 %v1107, %v371
    %v1140 = vadd.f32 %v1108, %v380
    %v1141 = vadd.f32 %v1109, %v389
    %v1142 = vadd.f32 %v1110, %v398
    %v1143 = vadd.f32 %v1111, %v407
    %v1144 = vadd.f32 %v1112, %v416
    %v1145 = vadd.f32 %v1113, %v425
    %v1146 = vadd.f32 %v1114, %v434
    %v1147 = vadd.f32 %v1115, %v443
    %v1148 = vadd.f32 %v1116, %v452
    %v1149 = vadd.f32 %v1117, %v461
    %v1150 = vadd.f32 %v1118, %v470
    %v1151 = vadd.f32 %v1119, %v479
    %v1152 = vadd.f32 %v1120, %v488
    %v1153 = vadd.f32 %v1121, %v497
    %v1154 = vadd.f32 %v1122, %v506
    %v1155 = vadd.f32 %v1123, %v515
    %v1156 = vadd.f32 %v1124, %v524
    %v1157 = vadd.f32 %v1125, %v533
    %v1158 = vadd.f32 %v1126, %v542
    %v1159 = vadd.f32 %v1127, %v551
    %v1160 = vmul.f32 %v1000, %v1128
    %v1161 = vmul.f32 %v1001, %v1129
    %v1162 = vmul.f32 %v1002, %v1130
    %v1163 = vmul.f32 %v1003, %v1131
    %v1164 = vmul.f32 %v1004, %v1132
    %v1165 = vmul.f32 %v1005, %v1133
    %v1166 = vmul.f32 %v1006, %v1134
    %v1167 = vmul.f32 %v1007, %v1135
    %v1168 = vmul.f32 %v1008, %v1136
    %v1169 = vmul.f32 %v1009, %v1137
    %v1170 = vmul.f32 %v1010, %v1138
    %v1171 = vmul.f32 %v1011, %v1139
    %v1172 = vmul.f32 %v1012, %v1140
    %v1173 = vmul.f32 %v1013, %v1141
    %v1174 = vmul.f32 %v1014, %v1142
    %v1175 = vmul.f32 %v1015, %v1143
    %v1176 = vmul.f32 %v1016, %v1144
    %v1177 = vmul.f32 %v1017, %v1145
    %v1178 = vmul.f32 %v1018, %v1146
    %v1179 = vmul.f32 %v1019, %v1147
    %v1180 = vmul.f32 %v1020, %v1148
    %v1181 = vmul.f32 %v1021, %v1149
    %v1182 = vmul.f32 %v1022, %v1150
    %v1183 = vmul.f32 %v1023, %v1151
    %v1184 = vmul.f32 %v1024, %v1152
    %v1185 = vmul.f32 %v1025, %v1153
    %v1186 = vmul.f32 %v1026, %v1154
    %v1187 = vmul.f32 %v1027, %v1155
    %v1188 = vmul.f32 %v1028, %v1156
    %v1189 = vmul.f32 %v1029, %v1157
    %v1190 = vmul.f32 %v1030, %v1158
    %v1191 = vmul.f32 %v1031, %v1159
    %v1192 = vadd.f32 %v1160, %v1161
    %v1193 = vadd.f32 %v1192, %v1162
    %v1194 = vadd.f32 %v1193, %v1163
    %v1195 = vadd.f32 %v1194, %v1164
    %v1196 = vadd.f32 %v1195, %v1165
    %v1197 = vadd.f32 %v1196, %v1166
    %v1198 = vadd.f32 %v1197, %v1167
    %v1199 = vadd.f32 %v1198, %v1168
    %v1200 = vadd.f32 %v1199, %v1169
    %v1201 = vadd.f32 %v1200, %v1170
    %v1202 = vadd.f32 %v1201, %v1171
    %v1203 = vadd.f32 %v1202, %v1172
    %v1204 = vadd.f32 %v1203, %v1173
    %v1205 = vadd.f32 %v1204, %v1174
    %v1206 = vadd.f32 %v1205, %v1175
    %v1207 = vadd.f32 %v1206, %v1176
    %v1208 = vadd.f32 %v1207, %v1177
    %v1209 = vadd.f32 %v1208, %v1178
    %v1210 = vadd.f32 %v1209, %v1179
    %v1211 = vadd.f32 %v1210, %v1180
    %v1212 = vadd.f32 %v1211, %v1181
    %v1213 = vadd.f32 %v1212, %v1182
    %v1214 = vadd.f32 %v1213, %v1183
    %v1215 = vadd.f32 %v1214, %v1184
    %v1216 = vadd.f32 %v1215, %v1185
    %v1217 = vadd.f32 %v1216, %v1186
    %v1218 = vadd.f32 %v1217, %v1187
    %v1219 = vadd.f32 %v1218, %v1188
    %v1220 = vadd.f32 %v1219, %v1189
    %v1221 = vadd.f32 %v1220, %v1190
    %v1222 = vadd.f32 %v1221, %v1191
    %1223 = vst [vmem:[#allocation7] sm:$0xff] %v1222
    // Predicated region
    $region18: #{tpu_custom_call.1} parent=1 // pred_check
      _
    $region19: #{tpu_custom_call.1} parent=1 // pred_check_branch
      %1225 = sbr.rel (0) target = $region21
    $region20: #{tpu_custom_call.1} parent=1 // pred_region
      %s1227 = ssub.s32 128, 128
      %1228 = vsyncadd [#allocation4], %s1227
      %s1230 = sshll.u32 [#allocation7], 4
      %s1231 = int_to_ptr.vmem [resolvable:$true] %s1230
      %1233 = dma.vmem_to_hbm [thread:$0]  %s1231, 128, %s2, [#allocation4]
    $region21: #{tpu_custom_call.1} parent=1 // pred_fallthru
      _
    // Predicated region
    $region22: #{tpu_custom_call.1} parent=1 // pred_check
      _
    $region23: #{tpu_custom_call.1} parent=1 // pred_check_branch
      %1235 = sbr.rel (0) target = $region25
    $region24: #{tpu_custom_call.1} parent=1 // pred_region
      %1236 = dma.done [#allocation4], 128
    $region25: #{tpu_custom_call.1} parent=1 // pred_fallthru
      _
    %1237 = vsyncpa [#allocation3], 1
    %1238 = vsyncpa [#allocation6], 1
    %1239 = vsyncpa [#allocation4], 1

</llo_original>
